<compile_context>
chip_gen: v7x
topology: tpu7x:2x2x1
jax: 0.10.0
libtpu: 0.0.40
codegen_flags: <defaults>
</compile_context>

<pallas_src>
import functools

import jax
import jax.numpy as jnp
from jax.experimental import pallas as pl
from jax.experimental.pallas import tpu as pltpu


def _round_up(x, m):
    return ((x + m - 1) // m) * m


def _link_pred_kernel(edge_op, num_nodes,
                      idx_ref, embt_ref,
                      w1_ref, b1_ref,
                      w2_ref, b2_ref,
                      w3_ref, b3_ref,
                      w4t_ref, b4_ref,
                      o_ref):
    cdt = embt_ref.dtype                       # compute dtype (bf16)
    idx = idx_ref[...]                         # (2, TB) int32, batch on lanes
    tb = idx.shape[1]
    uidx = idx[0:1, :]                         # (1, TB)
    didx = idx[1:2, :]                         # (1, TB)

    embt = embt_ref[...]                       # (input_dim, num_nodes) bf16

    if edge_op == "average":
        # Fold the edge op into the gather: a single matmul against the
        # averaged one-hot (entries 0 / 0.5 / 1.0 are exact in bf16).
        iota = jax.lax.broadcasted_iota(jnp.int32, (num_nodes, tb), 0)
        onehot = ((iota == uidx).astype(cdt) + (iota == didx).astype(cdt)) * 0.5
        ef = jnp.dot(embt, onehot, preferred_element_type=jnp.float32)
    else:
        # Fused gather: one (num_nodes, 2*TB) MXU matmul instead of two.
        idx_cat = jnp.concatenate([uidx, didx], axis=1)            # (1, 2*TB)
        iota = jax.lax.broadcasted_iota(jnp.int32, (num_nodes, 2 * tb), 0)
        onehot = (iota == idx_cat).astype(cdt)                     # (nodes, 2*TB)
        ud = jnp.dot(embt, onehot, preferred_element_type=jnp.float32)
        u = ud[:, :tb]                                             # (input_dim, TB)
        d = ud[:, tb:]
        if edge_op == "hadamard":
            ef = u * d
        elif edge_op == "weighted-l1":
            ef = jnp.abs(u - d)
        elif edge_op == "weighted-l2":
            ef = (u - d) ** 2
        else:
            raise ValueError(f"Unknown edge_op: {edge_op}")

    def dense_relu(w_ref, b_ref, x_f32):
        # bf16 MXU matmul, f32 accumulate, f32 bias + ReLU. Dropout = identity.
        y = jnp.dot(w_ref[...], x_f32.astype(w_ref.dtype),
                    preferred_element_type=jnp.float32) + b_ref[...]
        return jnp.maximum(y, 0.0)

    x = dense_relu(w1_ref, b1_ref, ef)         # (h1, TB)
    x = dense_relu(w2_ref, b2_ref, x)          # (h2, TB)
    x = dense_relu(w3_ref, b3_ref, x)          # (16, TB)

    # fc_out: (1,16) @ (16,TB) as a VPU multiply + sublane reduce (no MXU push).
    o = jnp.sum(w4t_ref[...] * x, axis=0, keepdims=True) + b4_ref[...]
    o_ref[...] = o.astype(o_ref.dtype)


def link_prediction_forward(params, node_embeddings, upstream_nodes,
                            downstream_nodes, edge_op, *,
                            tile_batch=1024, compute_dtype=jnp.bfloat16):
    """Gather + edge-op + 4-layer MLP fused in a single Pallas kernel."""
    num_nodes, input_dim = node_embeddings.shape
    batch = upstream_nodes.shape[0]

    # Lane-dense batch tile (multiple of 128), capped at tile_batch.
    tb = min(_round_up(tile_batch, 128), _round_up(batch, 128))
    batch_pad = _round_up(batch, tb)
    n_tiles = batch_pad // tb

    def prep_idx(idx):
        idx = jnp.clip(idx.astype(jnp.int32), 0, num_nodes - 1)  # jnp.take-style clamp
        return jnp.pad(idx, (0, batch_pad - batch))               # pad rows discarded

    idx = jnp.stack([prep_idx(upstream_nodes), prep_idx(downstream_nodes)],
                    axis=0)                                        # (2, batch_pad)

    # Transposed node table (input_dim, num_nodes), bf16, VMEM-resident.
    embt = node_embeddings.astype(compute_dtype).T

    w1 = params["w1"].astype(compute_dtype)
    w2 = params["w2"].astype(compute_dtype)
    w3 = params["w3"].astype(compute_dtype)
    w4t = params["w4"].T.astype(jnp.float32)                      # (16, 1), VPU path
    b1 = params["b1"].astype(jnp.float32)
    b2 = params["b2"].astype(jnp.float32)
    b3 = params["b3"].astype(jnp.float32)
    b4 = params["b4"].astype(jnp.float32)

    hidden1, hidden2 = w1.shape[0], w2.shape[0]

    idx_spec = pl.BlockSpec((2, tb), lambda i: (0, i))            # tiled along grid
    out_spec = pl.BlockSpec((1, tb), lambda i: (0, i))            # lane-dense logits
    # Whole-array, single-buffered, VMEM-resident constants (no per-step DMA).
    vmem_const = pl.BlockSpec(memory_space=pltpu.MemorySpace.VMEM)

    gather_cols = tb if edge_op == "average" else 2 * tb
    flops = (2 * num_nodes * input_dim * gather_cols * n_tiles
             + 2 * batch_pad * (input_dim * hidden1 + hidden1 * hidden2
                                + hidden2 * 16 + 16 * 1))
    bytes_accessed = (int(embt.size) * embt.dtype.itemsize
                      + sum(int(a.size) * a.dtype.itemsize
                            for a in (w1, b1, w2, b2, w3, b3, w4t, b4))
                      + int(idx.size) * 4 + batch_pad * 4)

    kernel = functools.partial(_link_pred_kernel, edge_op, num_nodes)

    out = pl.pallas_call(
        kernel,
        out_shape=jax.ShapeDtypeStruct((1, batch_pad), jnp.float32),
        grid=(n_tiles,),
        in_specs=[
            idx_spec,
            vmem_const,                # embt
            vmem_const, vmem_const,    # w1, b1
            vmem_const, vmem_const,    # w2, b2
            vmem_const, vmem_const,    # w3, b3
            vmem_const, vmem_const,    # w4t, b4
        ],
        out_specs=out_spec,
        compiler_params=pltpu.CompilerParams(
            dimension_semantics=("parallel",)),
        cost_estimate=pl.CostEstimate(flops=int(flops), transcendentals=0,
                                      bytes_accessed=int(bytes_accessed)),
    )(idx, embt, w1, b1, w2, b2, w3, b3, w4t, b4)

    return out[0, :batch].reshape(batch, 1)


def init_params(key, input_dim):
    """nn.Linear-style init; weights in torch (out, in) layout, biases (out, 1)."""
    hidden_dim1 = max(64, input_dim // 2)
    hidden_dim2 = max(32, input_dim // 4)
    dims = [(input_dim, hidden_dim1),
            (hidden_dim1, hidden_dim2),
            (hidden_dim2, 16),
            (16, 1)]
    params = {}
    keys = jax.random.split(key, 2 * len(dims))
    for i, (fan_in, fan_out) in enumerate(dims):
        bound = 1.0 / float(fan_in) ** 0.5
        w = jax.random.uniform(keys[2 * i], (fan_out, fan_in),
                               minval=-bound, maxval=bound, dtype=jnp.float32)
        b = jax.random.uniform(keys[2 * i + 1], (fan_out, 1),
                               minval=-bound, maxval=bound, dtype=jnp.float32)
        params[f"w{i + 1}"] = w
        params[f"b{i + 1}"] = b
    return params


def _edge_features(u, d, edge_op):
    if edge_op == "average":
        return (u + d) / 2
    if edge_op == "hadamard":
        return u * d
    if edge_op == "weighted-l1":
        return jnp.abs(u - d)
    if edge_op == "weighted-l2":
        return (u - d) ** 2
    raise ValueError(edge_op)


_hp_dot = functools.partial(jnp.matmul, precision=jax.lax.Precision.HIGHEST)


def _reference_forward(params, node_embeddings, up, dn, edge_op):
    """Pure-JAX f32 reference matching the torch module (eval mode)."""
    u = jnp.take(node_embeddings, up, axis=0)
    d = jnp.take(node_embeddings, dn, axis=0)
    ef = _edge_features(u, d, edge_op)
    x = jax.nn.relu(_hp_dot(ef, params["w1"].T) + params["b1"][:, 0])
    x = jax.nn.relu(_hp_dot(x, params["w2"].T) + params["b2"][:, 0])
    x = jax.nn.relu(_hp_dot(x, params["w3"].T) + params["b3"][:, 0])
    return _hp_dot(x, params["w4"].T) + params["b4"][:, 0]


def _bf16_emulated_reference(params, node_embeddings, up, dn, edge_op):
    """Replicates the kernel's mixed-precision casts (f32 accumulation)."""
    r = lambda a: a.astype(jnp.bfloat16).astype(jnp.float32)
    u = jnp.take(r(node_embeddings), up, axis=0)
    d = jnp.take(r(node_embeddings), dn, axis=0)
    ef = _edge_features(u, d, edge_op)
    x = jax.nn.relu(_hp_dot(r(ef), r(params["w1"]).T) + params["b1"][:, 0])
    x = jax.nn.relu(_hp_dot(r(x), r(params["w2"]).T) + params["b2"][:, 0])
    x = jax.nn.relu(_hp_dot(r(x), r(params["w3"]).T) + params["b3"][:, 0])
    return _hp_dot(x, params["w4"].T) + params["b4"][:, 0]


if __name__ == "__main__":
    key = jax.random.PRNGKey(0)
    k_emb, k_params, k_up, k_dn = jax.random.split(key, 4)

    num_nodes = 64
    input_dim = 128      # embedding dim -> hidden1 = 64, hidden2 = 32
    batch = 8            # number of edges

    node_embeddings = jax.random.normal(k_emb, (num_nodes, input_dim),
                                        dtype=jnp.float32)
    params = init_params(k_params, input_dim)

    upstream_nodes = jax.random.randint(k_up, (batch,), 0, num_nodes,
                                        dtype=jnp.int32)
    downstream_nodes = jax.random.randint(k_dn, (batch,), 0, num_nodes,
                                          dtype=jnp.int32)

    for edge_op in ("hadamard", "average", "weighted-l1", "weighted-l2"):
        logits = link_prediction_forward(params, node_embeddings,
                                         upstream_nodes, downstream_nodes,
                                         edge_op)
        logits = jax.block_until_ready(logits)
        assert logits.shape == (batch, 1), logits.shape
        assert jnp.all(jnp.isfinite(logits))

        # Tight check vs a reference that emulates the kernel's bf16 casts.
        ref_bf16 = _bf16_emulated_reference(params, node_embeddings,
                                            upstream_nodes, downstream_nodes,
                                            edge_op)
        assert jnp.allclose(logits, ref_bf16, atol=2e-3, rtol=2e-3), (
            edge_op, logits, ref_bf16)

        # Looser check vs the full-f32 torch-equivalent reference
        # (difference is bf16 quantization of the frozen table / weights).
        ref_f32 = _reference_forward(params, node_embeddings,
                                     upstream_nodes, downstream_nodes, edge_op)
        assert jnp.allclose(logits, ref_f32, atol=3e-2, rtol=3e-2), (
            edge_op, logits, ref_f32)

    print("KERNEL_OK")
</pallas_src>

<mosaic_0001>
module attributes {stable_mosaic.version = 11 : i64} {
  func.func @_link_pred_kernel(%arg0: i32, %arg1: memref<2x128xi32, #tpu.memory_space<vmem>>, %arg2: memref<128x64xbf16, #tpu.memory_space<vmem>>, %arg3: memref<64x128xbf16, #tpu.memory_space<vmem>>, %arg4: memref<64x1xf32, #tpu.memory_space<vmem>>, %arg5: memref<32x64xbf16, #tpu.memory_space<vmem>>, %arg6: memref<32x1xf32, #tpu.memory_space<vmem>>, %arg7: memref<16x32xbf16, #tpu.memory_space<vmem>>, %arg8: memref<16x1xf32, #tpu.memory_space<vmem>>, %arg9: memref<16x1xf32, #tpu.memory_space<vmem>>, %arg10: memref<1x1xf32, #tpu.memory_space<vmem>>, %arg11: memref<1x128xf32, #tpu.memory_space<vmem>>) attributes {dimension_semantics = [#tpu.dimension_semantics<parallel>], iteration_bounds = array<i64: 1>, scalar_prefetch = 0 : i64, scratch_operands = 0 : i64, tpu.core_type = #tpu.core_type<tc>, window_params = [{transform_indices = @transform_0, window_bounds = array<i64: 2, 128>}, {pipeline_mode = #tpu.pipeline_mode<synchronous>, transform_indices = @transform_1, window_bounds = array<i64: 128, 64>}, {pipeline_mode = #tpu.pipeline_mode<synchronous>, transform_indices = @transform_2, window_bounds = array<i64: 64, 128>}, {pipeline_mode = #tpu.pipeline_mode<synchronous>, transform_indices = @transform_3, window_bounds = array<i64: 64, 1>}, {pipeline_mode = #tpu.pipeline_mode<synchronous>, transform_indices = @transform_4, window_bounds = array<i64: 32, 64>}, {pipeline_mode = #tpu.pipeline_mode<synchronous>, transform_indices = @transform_5, window_bounds = array<i64: 32, 1>}, {pipeline_mode = #tpu.pipeline_mode<synchronous>, transform_indices = @transform_6, window_bounds = array<i64: 16, 32>}, {pipeline_mode = #tpu.pipeline_mode<synchronous>, transform_indices = @transform_7, window_bounds = array<i64: 16, 1>}, {pipeline_mode = #tpu.pipeline_mode<synchronous>, transform_indices = @transform_8, window_bounds = array<i64: 16, 1>}, {pipeline_mode = #tpu.pipeline_mode<synchronous>, transform_indices = @transform_9, window_bounds = array<i64: 1, 1>}, {transform_indices = @transform_10, window_bounds = array<i64: 1, 128>}]} {
    %c0 = arith.constant 0 : index
    %c0_0 = arith.constant 0 : index
    %0 = vector.load %arg1[%c0, %c0_0] : memref<2x128xi32, #tpu.memory_space<vmem>>, vector<2x128xi32>
    %1 = vector.extract_strided_slice %0 {offsets = [0, 0], sizes = [1, 128], strides = [1, 1]} : vector<2x128xi32> to vector<1x128xi32>
    %2 = vector.extract_strided_slice %0 {offsets = [1, 0], sizes = [1, 128], strides = [1, 1]} : vector<2x128xi32> to vector<1x128xi32>
    %c0_1 = arith.constant 0 : index
    %c0_2 = arith.constant 0 : index
    %3 = vector.load %arg2[%c0_1, %c0_2] : memref<128x64xbf16, #tpu.memory_space<vmem>>, vector<128x64xbf16>
    %4 = tpu.concatenate %1, %2 in 1 : vector<1x128xi32>, vector<1x128xi32> -> vector<1x256xi32>
    %5 = tpu.iota {dimensions = array<i32: 0>} : vector<64x256xi32>
    %6 = vector.broadcast %4 : vector<1x256xi32> to vector<64x256xi32>
    %7 = arith.cmpi eq, %5, %6 : vector<64x256xi32>
    %8 = arith.extui %7 : vector<64x256xi1> to vector<64x256xi32>
    %9 = arith.sitofp %8 : vector<64x256xi32> to vector<64x256xf32>
    %10 = arith.truncf %9 : vector<64x256xf32> to vector<64x256xbf16>
    %cst = arith.constant dense<0.000000e+00> : vector<128x256xf32>
    %11 = tpu.matmul %3, %10, %cst {dimension_numbers = #tpu.dot_dimension_numbers<[1], [0], [0], [1], [0, 0, 1, 1], [], []>} : vector<128x64xbf16>, vector<64x256xbf16>, vector<128x256xf32> -> vector<128x256xf32>
    %12 = vector.extract_strided_slice %11 {offsets = [0, 0], sizes = [128, 128], strides = [1, 1]} : vector<128x256xf32> to vector<128x128xf32>
    %13 = vector.extract_strided_slice %11 {offsets = [0, 128], sizes = [128, 128], strides = [1, 1]} : vector<128x256xf32> to vector<128x128xf32>
    %14 = arith.mulf %12, %13 : vector<128x128xf32>
    %c0_3 = arith.constant 0 : index
    %c0_4 = arith.constant 0 : index
    %15 = vector.load %arg3[%c0_3, %c0_4] : memref<64x128xbf16, #tpu.memory_space<vmem>>, vector<64x128xbf16>
    %16 = arith.truncf %14 : vector<128x128xf32> to vector<128x128xbf16>
    %cst_5 = arith.constant dense<0.000000e+00> : vector<64x128xf32>
    %17 = tpu.matmul %15, %16, %cst_5 {dimension_numbers = #tpu.dot_dimension_numbers<[1], [0], [0], [1], [0, 0, 1, 1], [], []>} : vector<64x128xbf16>, vector<128x128xbf16>, vector<64x128xf32> -> vector<64x128xf32>
    %c0_6 = arith.constant 0 : index
    %c0_7 = arith.constant 0 : index
    %18 = vector.load %arg4[%c0_6, %c0_7] : memref<64x1xf32, #tpu.memory_space<vmem>>, vector<64x1xf32>
    %19 = vector.broadcast %18 : vector<64x1xf32> to vector<64x128xf32>
    %20 = arith.addf %17, %19 : vector<64x128xf32>
    %cst_8 = arith.constant 0.000000e+00 : f32
    %21 = vector.broadcast %cst_8 : f32 to vector<64x128xf32>
    %22 = arith.maximumf %20, %21 : vector<64x128xf32>
    %c0_9 = arith.constant 0 : index
    %c0_10 = arith.constant 0 : index
    %23 = vector.load %arg5[%c0_9, %c0_10] : memref<32x64xbf16, #tpu.memory_space<vmem>>, vector<32x64xbf16>
    %24 = arith.truncf %22 : vector<64x128xf32> to vector<64x128xbf16>
    %cst_11 = arith.constant dense<0.000000e+00> : vector<32x128xf32>
    %25 = tpu.matmul %23, %24, %cst_11 {dimension_numbers = #tpu.dot_dimension_numbers<[1], [0], [0], [1], [0, 0, 1, 1], [], []>} : vector<32x64xbf16>, vector<64x128xbf16>, vector<32x128xf32> -> vector<32x128xf32>
    %c0_12 = arith.constant 0 : index
    %c0_13 = arith.constant 0 : index
    %26 = vector.load %arg6[%c0_12, %c0_13] : memref<32x1xf32, #tpu.memory_space<vmem>>, vector<32x1xf32>
    %27 = vector.broadcast %26 : vector<32x1xf32> to vector<32x128xf32>
    %28 = arith.addf %25, %27 : vector<32x128xf32>
    %cst_14 = arith.constant 0.000000e+00 : f32
    %29 = vector.broadcast %cst_14 : f32 to vector<32x128xf32>
    %30 = arith.maximumf %28, %29 : vector<32x128xf32>
    %c0_15 = arith.constant 0 : index
    %c0_16 = arith.constant 0 : index
    %31 = vector.load %arg7[%c0_15, %c0_16] : memref<16x32xbf16, #tpu.memory_space<vmem>>, vector<16x32xbf16>
    %32 = arith.truncf %30 : vector<32x128xf32> to vector<32x128xbf16>
    %cst_17 = arith.constant dense<0.000000e+00> : vector<16x128xf32>
    %33 = tpu.matmul %31, %32, %cst_17 {dimension_numbers = #tpu.dot_dimension_numbers<[1], [0], [0], [1], [0, 0, 1, 1], [], []>} : vector<16x32xbf16>, vector<32x128xbf16>, vector<16x128xf32> -> vector<16x128xf32>
    %c0_18 = arith.constant 0 : index
    %c0_19 = arith.constant 0 : index
    %34 = vector.load %arg8[%c0_18, %c0_19] : memref<16x1xf32, #tpu.memory_space<vmem>>, vector<16x1xf32>
    %35 = vector.broadcast %34 : vector<16x1xf32> to vector<16x128xf32>
    %36 = arith.addf %33, %35 : vector<16x128xf32>
    %cst_20 = arith.constant 0.000000e+00 : f32
    %37 = vector.broadcast %cst_20 : f32 to vector<16x128xf32>
    %38 = arith.maximumf %36, %37 : vector<16x128xf32>
    %c0_21 = arith.constant 0 : index
    %c0_22 = arith.constant 0 : index
    %39 = vector.load %arg9[%c0_21, %c0_22] : memref<16x1xf32, #tpu.memory_space<vmem>>, vector<16x1xf32>
    %40 = vector.broadcast %39 : vector<16x1xf32> to vector<16x128xf32>
    %41 = arith.mulf %40, %38 : vector<16x128xf32>
    %cst_23 = arith.constant dense<0.000000e+00> : vector<128xf32>
    %42 = vector.multi_reduction <add>, %41, %cst_23 [0] : vector<16x128xf32> to vector<128xf32>
    %43 = vector.shape_cast %42 : vector<128xf32> to vector<1x128xf32>
    %c0_24 = arith.constant 0 : index
    %c0_25 = arith.constant 0 : index
    %44 = vector.load %arg10[%c0_24, %c0_25] : memref<1x1xf32, #tpu.memory_space<vmem>>, vector<1x1xf32>
    %45 = vector.broadcast %44 : vector<1x1xf32> to vector<1x128xf32>
    %46 = arith.addf %43, %45 : vector<1x128xf32>
    %c0_26 = arith.constant 0 : index
    %c0_27 = arith.constant 0 : index
    %47 = vector.load %arg11[%c0_26, %c0_27] : memref<1x128xf32, #tpu.memory_space<vmem>>, vector<1x128xf32>
    tpu.vector_store %arg11[%c0_26, %c0_27], %46 {strides = array<i32>} : memref<1x128xf32, #tpu.memory_space<vmem>>, vector<1x128xf32>,
    return
  }
  func.func @transform_0(%arg0: i32) -> (i32, i32) {
    %c0_i32 = arith.constant 0 : i32
    %c0_i32_0 = arith.constant 0 : i32
    return %c0_i32, %arg0 : i32, i32
  }
  func.func @transform_1(%arg0: i32) -> (i32, i32) {
    %c0_i32 = arith.constant 0 : i32
    %c0_i32_0 = arith.constant 0 : i32
    %c0_i32_1 = arith.constant 0 : i32
    return %c0_i32, %c0_i32_0 : i32, i32
  }
  func.func @transform_2(%arg0: i32) -> (i32, i32) {
    %c0_i32 = arith.constant 0 : i32
    %c0_i32_0 = arith.constant 0 : i32
    %c0_i32_1 = arith.constant 0 : i32
    return %c0_i32, %c0_i32_0 : i32, i32
  }
  func.func @transform_3(%arg0: i32) -> (i32, i32) {
    %c0_i32 = arith.constant 0 : i32
    %c0_i32_0 = arith.constant 0 : i32
    %c0_i32_1 = arith.constant 0 : i32
    return %c0_i32, %c0_i32_0 : i32, i32
  }
  func.func @transform_4(%arg0: i32) -> (i32, i32) {
    %c0_i32 = arith.constant 0 : i32
    %c0_i32_0 = arith.constant 0 : i32
    %c0_i32_1 = arith.constant 0 : i32
    return %c0_i32, %c0_i32_0 : i32, i32
  }
  func.func @transform_5(%arg0: i32) -> (i32, i32) {
    %c0_i32 = arith.constant 0 : i32
    %c0_i32_0 = arith.constant 0 : i32
    %c0_i32_1 = arith.constant 0 : i32
    return %c0_i32, %c0_i32_0 : i32, i32
  }
  func.func @transform_6(%arg0: i32) -> (i32, i32) {
    %c0_i32 = arith.constant 0 : i32
    %c0_i32_0 = arith.constant 0 : i32
    %c0_i32_1 = arith.constant 0 : i32
    return %c0_i32, %c0_i32_0 : i32, i32
  }
  func.func @transform_7(%arg0: i32) -> (i32, i32) {
    %c0_i32 = arith.constant 0 : i32
    %c0_i32_0 = arith.constant 0 : i32
    %c0_i32_1 = arith.constant 0 : i32
    return %c0_i32, %c0_i32_0 : i32, i32
  }
  func.func @transform_8(%arg0: i32) -> (i32, i32) {
    %c0_i32 = arith.constant 0 : i32
    %c0_i32_0 = arith.constant 0 : i32
    %c0_i32_1 = arith.constant 0 : i32
    return %c0_i32, %c0_i32_0 : i32, i32
  }
  func.func @transform_9(%arg0: i32) -> (i32, i32) {
    %c0_i32 = arith.constant 0 : i32
    %c0_i32_0 = arith.constant 0 : i32
    %c0_i32_1 = arith.constant 0 : i32
    return %c0_i32, %c0_i32_0 : i32, i32
  }
  func.func @transform_10(%arg0: i32) -> (i32, i32) {
    %c0_i32 = arith.constant 0 : i32
    %c0_i32_0 = arith.constant 0 : i32
    return %c0_i32, %arg0 : i32, i32
  }
}

</mosaic_0001>

<llo_original>
// kernel: tpu_custom_call.1
$region0: #{tpu_custom_call.1}
  #allocation0 [shape = 'u32[]', space=smem, size = 0x4, offset = 0x4, fixed_abs, tag = 'smem constant byte address 0x4 - core index']
  #allocation1 [shape = 'u32[144,128]{1,0:T(1,128)}', space=vmem, size = 0x12000, scoped, tag = 'internal scratch']
  #allocation2 [shape = 'f32[1,1]{1,0:T(1,128)S(1)}', space=vmem, size = 0x200, scoped, tag = 'scoped memory for tpu_custom_call.1']
  %s0 = inlined_call_operand.vmem [shape: s32[2,128], index: 0, kind: input, shape index: {}]
  %s1 = inlined_call_operand.vmem [shape: bf16[128,64], index: 1, kind: input, shape index: {}]
  %s2 = inlined_call_operand.vmem [shape: bf16[64,128], index: 2, kind: input, shape index: {}]
  %s3 = inlined_call_operand.vmem [shape: f32[64,1], index: 3, kind: input, shape index: {}]
  %s4 = inlined_call_operand.vmem [shape: bf16[32,64], index: 4, kind: input, shape index: {}]
  %s5 = inlined_call_operand.vmem [shape: f32[32,1], index: 5, kind: input, shape index: {}]
  %s6 = inlined_call_operand.vmem [shape: bf16[16,32], index: 6, kind: input, shape index: {}]
  %s7 = inlined_call_operand.vmem [shape: f32[16,1], index: 7, kind: input, shape index: {}]
  %s8 = inlined_call_operand.vmem [shape: f32[16,1], index: 8, kind: input, shape index: {}]
  %s9 = inlined_call_operand.<no memory space> [shape: f32[1,1], index: 9, kind: input, shape index: {}]
  %s10 = inlined_call_operand.hbm [shape: f32[1,128], index: 10, kind: output, shape index: {}]
  %s11 = sld [smem:[#allocation0]]
  $region50: #{tpu_custom_call.1} parent=0
    _
  %s13 = ssub.s32 1, %s11
  %s14 = scalar_select 0, %s13, %s11
  %v15 = vstv %s9
  %16 = vst [vmem:[#allocation2] sm:$0x1] %v15
  $region1: #{tpu_custom_call.1} parent=0
    #allocation3 [shape = 'u8[512]{0}', space=vmem, size = 0x400, scoped, tag = 'output window, operand 0, single buffered']
    #allocation4 [shape = 's32[1]{0}', space=sflag, size = 0x4, scoped, tag = 'scoped memory for tpu_custom_call.1']
    %17 = vsyncpa [#allocation4], 0
    // Predicated region
    $region2: #{tpu_custom_call.1} parent=1 // pred_check
      _
    $region3: #{tpu_custom_call.1} parent=1 // pred_check_branch
      %19 = sbr.rel (0) target = $region5
    $region4: #{tpu_custom_call.1} parent=1 // pred_region
      _
    $region5: #{tpu_custom_call.1} parent=1 // pred_fallthru
      _
    // Predicated region
    $region6: #{tpu_custom_call.1} parent=1 // pred_check
      _
    $region7: #{tpu_custom_call.1} parent=1 // pred_check_branch
      %21 = sbr.rel (0) target = $region9
    $region8: #{tpu_custom_call.1} parent=1 // pred_region
      _
    $region9: #{tpu_custom_call.1} parent=1 // pred_fallthru
      _
    // Predicated region
    $region10: #{tpu_custom_call.1} parent=1 // pred_check
      _
    $region11: #{tpu_custom_call.1} parent=1 // pred_check_branch
      %23 = sbr.rel (0) target = $region13
    $region12: #{tpu_custom_call.1} parent=1 // pred_region
      _
    $region13: #{tpu_custom_call.1} parent=1 // pred_fallthru
      _
    // Predicated region
    $region14: #{tpu_custom_call.1} parent=1 // pred_check
      _
    $region15: #{tpu_custom_call.1} parent=1 // pred_check_branch
      %25 = sbr.rel (0) target = $region17
    $region16: #{tpu_custom_call.1} parent=1 // pred_region
      _
    $region17: #{tpu_custom_call.1} parent=1 // pred_fallthru
      _
    // Predicated region
    $region18: #{tpu_custom_call.1} parent=1 // pred_check
      _
    $region19: #{tpu_custom_call.1} parent=1 // pred_check_branch
      %27 = sbr.rel (0) target = $region21
    $region20: #{tpu_custom_call.1} parent=1 // pred_region
      _
    $region21: #{tpu_custom_call.1} parent=1 // pred_fallthru
      _
    // Predicated region
    $region22: #{tpu_custom_call.1} parent=1 // pred_check
      _
    $region23: #{tpu_custom_call.1} parent=1 // pred_check_branch
      %29 = sbr.rel (0) target = $region25
    $region24: #{tpu_custom_call.1} parent=1 // pred_region
      _
    $region25: #{tpu_custom_call.1} parent=1 // pred_fallthru
      _
    // Predicated region
    $region26: #{tpu_custom_call.1} parent=1 // pred_check
      _
    $region27: #{tpu_custom_call.1} parent=1 // pred_check_branch
      %31 = sbr.rel (0) target = $region29
    $region28: #{tpu_custom_call.1} parent=1 // pred_region
      _
    $region29: #{tpu_custom_call.1} parent=1 // pred_fallthru
      _
    // Predicated region
    $region30: #{tpu_custom_call.1} parent=1 // pred_check
      _
    $region31: #{tpu_custom_call.1} parent=1 // pred_check_branch
      %33 = sbr.rel (0) target = $region33
    $region32: #{tpu_custom_call.1} parent=1 // pred_region
      _
    $region33: #{tpu_custom_call.1} parent=1 // pred_fallthru
      _
    // Predicated region
    $region34: #{tpu_custom_call.1} parent=1 // pred_check
      _
    $region35: #{tpu_custom_call.1} parent=1 // pred_check_branch
      %35 = sbr.rel (0) target = $region37
    $region36: #{tpu_custom_call.1} parent=1 // pred_region
      _
    $region37: #{tpu_custom_call.1} parent=1 // pred_fallthru
      _
    // Predicated region
    $region38: #{tpu_custom_call.1} parent=1 // pred_check
      _
    $region39: #{tpu_custom_call.1} parent=1 // pred_check_branch
      %37 = sbr.rel (0) target = $region41
    $region40: #{tpu_custom_call.1} parent=1 // pred_region
      _
    $region41: #{tpu_custom_call.1} parent=1 // pred_fallthru
      _
    %v39 = vld [vmem:[%s0] sm:$0x3]
    %v40 = vld [vmem:[%s1] sm:$0xf]
    %v41 = vld [vmem:[%s1 + $0x4] sm:$0xf]
    %v42 = vld [vmem:[%s1 + $0x8] sm:$0xf]
    %v43 = vld [vmem:[%s1 + $0xc] sm:$0xf]
    %v44 = vld [vmem:[%s1 + $0x10] sm:$0xf]
    %v45 = vld [vmem:[%s1 + $0x14] sm:$0xf]
    %v46 = vld [vmem:[%s1 + $0x18] sm:$0xf]
    %v47 = vld [vmem:[%s1 + $0x1c] sm:$0xf]
    %v48 = vld [vmem:[%s1 + $0x20] sm:$0xf]
    %v49 = vld [vmem:[%s1 + $0x24] sm:$0xf]
    %v50 = vld [vmem:[%s1 + $0x28] sm:$0xf]
    %v51 = vld [vmem:[%s1 + $0x2c] sm:$0xf]
    %v52 = vld [vmem:[%s1 + $0x30] sm:$0xf]
    %v53 = vld [vmem:[%s1 + $0x34] sm:$0xf]
    %v54 = vld [vmem:[%s1 + $0x38] sm:$0xf]
    %v55 = vld [vmem:[%s1 + $0x3c] sm:$0xf]
    %v56 = vrot.slane %v39, 1
    %v57 = vlaneseq
    %v58 = vshrl.u32 %v57, 7
    %v59 = vadd.s32 %v58, 8
    %v60 = vadd.s32 %v58, 16
    %v61 = vadd.s32 %v58, 24
    %v62 = vadd.s32 %v58, 32
    %v63 = vadd.s32 %v58, 40
    %v64 = vadd.s32 %v58, 48
    %v65 = vadd.s32 %v58, 56
    %v66 = vlaneseq
    %v67 = vshrl.u32 %v66, 7
    %v68 = vsub.s32 0, %v67
    %v69 = vrot.slane %v39, %v68
    %v70 = vlaneseq
    %v71 = vshrl.u32 %v70, 7
    %v72 = vsub.s32 0, %v71
    %v73 = vrot.slane %v56, %v72
    %vm74 = vcmp.eq.s32.totalorder %v58, %v69
    %vm75 = vcmp.eq.s32.totalorder %v58, %v73
    %vm76 = vcmp.eq.s32.totalorder %v59, %v69
    %vm77 = vcmp.eq.s32.totalorder %v59, %v73
    %vm78 = vcmp.eq.s32.totalorder %v60, %v69
    %vm79 = vcmp.eq.s32.totalorder %v60, %v73
    %vm80 = vcmp.eq.s32.totalorder %v61, %v69
    %vm81 = vcmp.eq.s32.totalorder %v61, %v73
    %vm82 = vcmp.eq.s32.totalorder %v62, %v69
    %vm83 = vcmp.eq.s32.totalorder %v62, %v73
    %vm84 = vcmp.eq.s32.totalorder %v63, %v69
    %vm85 = vcmp.eq.s32.totalorder %v63, %v73
    %vm86 = vcmp.eq.s32.totalorder %v64, %v69
    %vm87 = vcmp.eq.s32.totalorder %v64, %v73
    %vm88 = vcmp.eq.s32.totalorder %v65, %v69
    %vm89 = vcmp.eq.s32.totalorder %v65, %v73
    %v90 = vsel %vm74, 1, 0
    %v91 = vsel %vm75, 1, 0
    %v92 = vsel %vm76, 1, 0
    %v93 = vsel %vm77, 1, 0
    %v94 = vsel %vm78, 1, 0
    %v95 = vsel %vm79, 1, 0
    %v96 = vsel %vm80, 1, 0
    %v97 = vsel %vm81, 1, 0
    %v98 = vsel %vm82, 1, 0
    %v99 = vsel %vm83, 1, 0
    %v100 = vsel %vm84, 1, 0
    %v101 = vsel %vm85, 1, 0
    %v102 = vsel %vm86, 1, 0
    %v103 = vsel %vm87, 1, 0
    %v104 = vsel %vm88, 1, 0
    %v105 = vsel %vm89, 1, 0
    %v106 = vcvt.s32.f32 %v90
    %v107 = vcvt.s32.f32 %v91
    %v108 = vcvt.s32.f32 %v92
    %v109 = vcvt.s32.f32 %v93
    %v110 = vcvt.s32.f32 %v94
    %v111 = vcvt.s32.f32 %v95
    %v112 = vcvt.s32.f32 %v96
    %v113 = vcvt.s32.f32 %v97
    %v114 = vcvt.s32.f32 %v98
    %v115 = vcvt.s32.f32 %v99
    %v116 = vcvt.s32.f32 %v100
    %v117 = vcvt.s32.f32 %v101
    %v118 = vcvt.s32.f32 %v102
    %v119 = vcvt.s32.f32 %v103
    %v120 = vcvt.s32.f32 %v104
    %v121 = vcvt.s32.f32 %v105
    %v122 = vpack.c.bf16 %v108, %v106
    %v123 = vpack.c.bf16 %v109, %v107
    %v124 = vpack.c.bf16 %v112, %v110
    %v125 = vpack.c.bf16 %v113, %v111
    %v126 = vpack.c.bf16 %v116, %v114
    %v127 = vpack.c.bf16 %v117, %v115
    %v128 = vpack.c.bf16 %v120, %v118
    %v129 = vpack.c.bf16 %v121, %v119
    %v146 = vunpack.c.l.b16 %v40
    %v147 = vunpack.c.l.b16 %v41
    %v148 = vunpack.c.l.b16 %v42
    %v149 = vunpack.c.l.b16 %v43
    %v150 = vunpack.c.l.b16 %v44
    %v151 = vunpack.c.l.b16 %v45
    %v152 = vunpack.c.l.b16 %v46
    %v153 = vunpack.c.l.b16 %v47
    %v154 = vunpack.c.l.b16 %v48
    %v155 = vunpack.c.l.b16 %v49
    %v156 = vunpack.c.l.b16 %v50
    %v157 = vunpack.c.l.b16 %v51
    %v158 = vunpack.c.l.b16 %v52
    %v159 = vunpack.c.l.b16 %v53
    %v160 = vunpack.c.l.b16 %v54
    %v161 = vunpack.c.l.b16 %v55
    %v162 = vpack.c.b16 %v147, %v146
    %v163 = vpack.c.b16 %v149, %v148
    %v164 = vpack.c.b16 %v151, %v150
    %v165 = vpack.c.b16 %v153, %v152
    %v166 = vpack.c.b16 %v155, %v154
    %v167 = vpack.c.b16 %v157, %v156
    %v168 = vpack.c.b16 %v159, %v158
    %v169 = vpack.c.b16 %v161, %v160
    %vm170 = vcmask 523264
    %v172 = vsel %vm170, %v162, 0
    %v175 = vsel %vm170, %v163, 0
    %v178 = vsel %vm170, %v164, 0
    %v181 = vsel %vm170, %v165, 0
    %v184 = vsel %vm170, %v166, 0
    %v187 = vsel %vm170, %v167, 0
    %v190 = vsel %vm170, %v168, 0
    %v193 = vsel %vm170, %v169, 0
    %195 = vmatprep.subr.bf16.mxu0 %v123
    %196 = vmatpush1.bf16.msra.mxu0 %v122
    %197 = vmatprep.subr.bf16.mxu0 %v125
    %198 = vmatpush1.bf16.msra.mxu0 %v124
    %199 = vmatprep.subr.bf16.mxu0 %v127
    %200 = vmatpush1.bf16.msra.mxu0 %v126
    %201 = vmatprep.subr.bf16.mxu0 %v129
    %202 = vmatpush1.bf16.msra.mxu0 %v128
    %203 = vmatprep.subr.bf16.mxu0 0
    %204 = vmatpush1.bf16.msra.mxu0 0
    %205 = vmatprep.subr.bf16.mxu0 0
    %206 = vmatpush1.bf16.msra.mxu0 0
    %207 = vmatprep.subr.bf16.mxu0 0
    %208 = vmatpush1.bf16.msra.mxu0 0
    %209 = vmatprep.subr.bf16.mxu0 0
    %210 = vmatpush1.bf16.msra.mxu0 0
    %211 = vmatprep.subr.bf16.mxu0 0
    %212 = vmatpush1.bf16.msra.mxu0 0
    %213 = vmatprep.subr.bf16.mxu0 0
    %214 = vmatpush1.bf16.msra.mxu0 0
    %215 = vmatprep.subr.bf16.mxu0 0
    %216 = vmatpush1.bf16.msra.mxu0 0
    %217 = vmatprep.subr.bf16.mxu0 0
    %218 = vmatpush1.bf16.msra.mxu0 0
    %219 = vmatprep.subr.bf16.mxu0 0
    %220 = vmatpush1.bf16.msra.mxu0 0
    %221 = vmatprep.subr.bf16.mxu0 0
    %222 = vmatpush1.bf16.msra.mxu0 0
    %223 = vmatprep.subr.bf16.mxu0 0
    %224 = vmatpush1.bf16.msra.mxu0 0
    %225 = vmatprep.subr.bf16.mxu0 0
    %226 = vmatpush1.bf16.msra.mxu0 0
    %227 = vmatprep.mubr.bf16.mxu0 0
    %228 = vmatmul.mubr.bf16.gmra.mrb[0].mxu0 %v172
    %v229 = vpop.f32.mrb[0].mxu0
    %v230 = vadd.f32 0.0, %v229
    %v231 = vpop.f32.mrb[0].mxu0
    %v232 = vadd.f32 0.0, %v231
    %v233 = vpop.f32.mrb[0].mxu0
    %v234 = vadd.f32 0.0, %v233
    %v235 = vpop.f32.mrb[0].mxu0
    %v236 = vadd.f32 0.0, %v235
    %237 = vmatprep.mubr.bf16.mxu0 0
    %238 = vmatmul.mubr.bf16.gmra.mrb[0].mxu0 %v175
    %v239 = vpop.f32.mrb[0].mxu0
    %v240 = vadd.f32 0.0, %v239
    %v241 = vpop.f32.mrb[0].mxu0
    %v242 = vadd.f32 0.0, %v241
    %v243 = vpop.f32.mrb[0].mxu0
    %v244 = vadd.f32 0.0, %v243
    %v245 = vpop.f32.mrb[0].mxu0
    %v246 = vadd.f32 0.0, %v245
    %247 = vmatprep.mubr.bf16.mxu0 0
    %248 = vmatmul.mubr.bf16.gmra.mrb[0].mxu0 %v178
    %v249 = vpop.f32.mrb[0].mxu0
    %v250 = vadd.f32 0.0, %v249
    %v251 = vpop.f32.mrb[0].mxu0
    %v252 = vadd.f32 0.0, %v251
    %v253 = vpop.f32.mrb[0].mxu0
    %v254 = vadd.f32 0.0, %v253
    %v255 = vpop.f32.mrb[0].mxu0
    %v256 = vadd.f32 0.0, %v255
    %257 = vmatprep.mubr.bf16.mxu0 0
    %258 = vmatmul.mubr.bf16.gmra.mrb[0].mxu0 %v181
    %v259 = vpop.f32.mrb[0].mxu0
    %v260 = vadd.f32 0.0, %v259
    %v261 = vpop.f32.mrb[0].mxu0
    %v262 = vadd.f32 0.0, %v261
    %v263 = vpop.f32.mrb[0].mxu0
    %v264 = vadd.f32 0.0, %v263
    %v265 = vpop.f32.mrb[0].mxu0
    %v266 = vadd.f32 0.0, %v265
    %267 = vmatprep.mubr.bf16.mxu0 0
    %268 = vmatmul.mubr.bf16.gmra.mrb[0].mxu0 %v184
    %v269 = vpop.f32.mrb[0].mxu0
    %v270 = vadd.f32 0.0, %v269
    %v271 = vpop.f32.mrb[0].mxu0
    %v272 = vadd.f32 0.0, %v271
    %v273 = vpop.f32.mrb[0].mxu0
    %v274 = vadd.f32 0.0, %v273
    %v275 = vpop.f32.mrb[0].mxu0
    %v276 = vadd.f32 0.0, %v275
    %277 = vmatprep.mubr.bf16.mxu0 0
    %278 = vmatmul.mubr.bf16.gmra.mrb[0].mxu0 %v187
    %v279 = vpop.f32.mrb[0].mxu0
    %v280 = vadd.f32 0.0, %v279
    %v281 = vpop.f32.mrb[0].mxu0
    %v282 = vadd.f32 0.0, %v281
    %v283 = vpop.f32.mrb[0].mxu0
    %v284 = vadd.f32 0.0, %v283
    %v285 = vpop.f32.mrb[0].mxu0
    %v286 = vadd.f32 0.0, %v285
    %287 = vmatprep.mubr.bf16.mxu0 0
    %288 = vmatmul.mubr.bf16.gmra.mrb[0].mxu0 %v190
    %v289 = vpop.f32.mrb[0].mxu0
    %v290 = vadd.f32 0.0, %v289
    %v291 = vpop.f32.mrb[0].mxu0
    %v292 = vadd.f32 0.0, %v291
    %v293 = vpop.f32.mrb[0].mxu0
    %v294 = vadd.f32 0.0, %v293
    %v295 = vpop.f32.mrb[0].mxu0
    %v296 = vadd.f32 0.0, %v295
    %297 = vmatprep.mubr.bf16.mxu0 0
    %298 = vmatmul.mubr.bf16.gmra.mrb[0].mxu0 %v193
    %v299 = vpop.f32.mrb[0].mxu0
    %v300 = vadd.f32 0.0, %v299
    %v301 = vpop.f32.mrb[0].mxu0
    %v302 = vadd.f32 0.0, %v301
    %v303 = vpop.f32.mrb[0].mxu0
    %v304 = vadd.f32 0.0, %v303
    %v305 = vpop.f32.mrb[0].mxu0
    %v306 = vadd.f32 0.0, %v305
    %307 = vdwg.mxu0
    %v308 = vmul.f32 %v230, %v232
    %v309 = vmul.f32 %v234, %v236
    %v310 = vmul.f32 %v240, %v242
    %v311 = vmul.f32 %v244, %v246
    %v312 = vmul.f32 %v250, %v252
    %v313 = vmul.f32 %v254, %v256
    %v314 = vmul.f32 %v260, %v262
    %v315 = vmul.f32 %v264, %v266
    %v316 = vmul.f32 %v270, %v272
    %v317 = vmul.f32 %v274, %v276
    %v318 = vmul.f32 %v280, %v282
    %v319 = vmul.f32 %v284, %v286
    %v320 = vmul.f32 %v290, %v292
    %v321 = vmul.f32 %v294, %v296
    %v322 = vmul.f32 %v300, %v302
    %v323 = vmul.f32 %v304, %v306
    %v324 = vld [vmem:[%s2] sm:$0xf]
    %v325 = vld [vmem:[%s2 + $0x4] sm:$0xf]
    %v326 = vld [vmem:[%s2 + $0x8] sm:$0xf]
    %v327 = vld [vmem:[%s2 + $0xc] sm:$0xf]
    %v328 = vld [vmem:[%s2 + $0x10] sm:$0xf]
    %v329 = vld [vmem:[%s2 + $0x14] sm:$0xf]
    %v330 = vld [vmem:[%s2 + $0x18] sm:$0xf]
    %v331 = vld [vmem:[%s2 + $0x1c] sm:$0xf]
    %v332 = vpack.c.bf16 %v309, %v308
    %v333 = vpack.c.bf16 %v311, %v310
    %v334 = vpack.c.bf16 %v313, %v312
    %v335 = vpack.c.bf16 %v315, %v314
    %v336 = vpack.c.bf16 %v317, %v316
    %v337 = vpack.c.bf16 %v319, %v318
    %v338 = vpack.c.bf16 %v321, %v320
    %v339 = vpack.c.bf16 %v323, %v322
    %v340 = vld [vmem:[%s3] sm:$0xff]
    %v341 = vld [vmem:[%s3 + $0x8] sm:$0xff]
    %v342 = vld [vmem:[%s3 + $0x10] sm:$0xff]
    %v343 = vld [vmem:[%s3 + $0x18] sm:$0xff]
    %v344 = vld [vmem:[%s3 + $0x20] sm:$0xff]
    %v345 = vld [vmem:[%s3 + $0x28] sm:$0xff]
    %v346 = vld [vmem:[%s3 + $0x30] sm:$0xff]
    %v347 = vld [vmem:[%s3 + $0x38] sm:$0xff]
    %349 = vset.pattern.permute.xlu0 0
    %350 = vperm.xlu0 %349, %v340
    %v351 = vpop.permute.xlu0 %350
    %354 = vset.pattern.permute.xlu0 0
    %355 = vperm.xlu0 %354, %v341
    %v356 = vpop.permute.xlu0 %355
    %359 = vset.pattern.permute.xlu0 0
    %360 = vperm.xlu0 %359, %v342
    %v361 = vpop.permute.xlu0 %360
    %364 = vset.pattern.permute.xlu0 0
    %365 = vperm.xlu0 %364, %v343
    %v366 = vpop.permute.xlu0 %365
    %369 = vset.pattern.permute.xlu0 0
    %370 = vperm.xlu0 %369, %v344
    %v371 = vpop.permute.xlu0 %370
    %374 = vset.pattern.permute.xlu0 0
    %375 = vperm.xlu0 %374, %v345
    %v376 = vpop.permute.xlu0 %375
    %379 = vset.pattern.permute.xlu0 0
    %380 = vperm.xlu0 %379, %v346
    %v381 = vpop.permute.xlu0 %380
    %384 = vset.pattern.permute.xlu0 0
    %385 = vperm.xlu0 %384, %v347
    %v386 = vpop.permute.xlu0 %385
    %v396 = vunpack.c.l.b16 %v324
    %v397 = vunpack.c.l.b16 %v325
    %v398 = vunpack.c.l.b16 %v326
    %v399 = vunpack.c.l.b16 %v327
    %v400 = vunpack.c.l.b16 %v328
    %v401 = vunpack.c.l.b16 %v329
    %v402 = vunpack.c.l.b16 %v330
    %v403 = vunpack.c.l.b16 %v331
    %v404 = vpack.c.b16 %v397, %v396
    %v405 = vpack.c.b16 %v399, %v398
    %v406 = vpack.c.b16 %v401, %v400
    %v407 = vpack.c.b16 %v403, %v402
    %412 = vmatprep.subr.bf16.mxu0 0
    %413 = vmatpush1.bf16.msra.mxu0 %v332
    %414 = vmatprep.subr.bf16.mxu0 0
    %415 = vmatpush1.bf16.msra.mxu0 %v333
    %416 = vmatprep.subr.bf16.mxu0 0
    %417 = vmatpush1.bf16.msra.mxu0 %v334
    %418 = vmatprep.subr.bf16.mxu0 0
    %419 = vmatpush1.bf16.msra.mxu0 %v335
    %420 = vmatprep.subr.bf16.mxu0 0
    %421 = vmatpush1.bf16.msra.mxu0 %v336
    %422 = vmatprep.subr.bf16.mxu0 0
    %423 = vmatpush1.bf16.msra.mxu0 %v337
    %424 = vmatprep.subr.bf16.mxu0 0
    %425 = vmatpush1.bf16.msra.mxu0 %v338
    %426 = vmatprep.subr.bf16.mxu0 0
    %427 = vmatpush1.bf16.msra.mxu0 %v339
    %428 = vmatprep.subr.bf16.mxu0 0
    %429 = vmatpush1.bf16.msra.mxu0 0
    %430 = vmatprep.subr.bf16.mxu0 0
    %431 = vmatpush1.bf16.msra.mxu0 0
    %432 = vmatprep.subr.bf16.mxu0 0
    %433 = vmatpush1.bf16.msra.mxu0 0
    %434 = vmatprep.subr.bf16.mxu0 0
    %435 = vmatpush1.bf16.msra.mxu0 0
    %436 = vmatprep.subr.bf16.mxu0 0
    %437 = vmatpush1.bf16.msra.mxu0 0
    %438 = vmatprep.subr.bf16.mxu0 0
    %439 = vmatpush1.bf16.msra.mxu0 0
    %440 = vmatprep.subr.bf16.mxu0 0
    %441 = vmatpush1.bf16.msra.mxu0 0
    %442 = vmatprep.subr.bf16.mxu0 0
    %443 = vmatpush1.bf16.msra.mxu0 0
    %444 = vmatprep.mubr.bf16.mxu0 0
    %445 = vmatmul.mubr.bf16.gmra.mrb[0].mxu0 %v404
    %v446 = vpop.f32.mrb[0].mxu0
    %v447 = vadd.f32 %v351, %v446
    %v448 = vpop.f32.mrb[0].mxu0
    %v449 = vpop.f32.mrb[0].mxu0
    %v450 = vadd.f32 %v356, %v449
    %v451 = vpop.f32.mrb[0].mxu0
    %452 = vmatprep.mubr.bf16.mxu0 0
    %453 = vmatmul.mubr.bf16.gmra.mrb[0].mxu0 %v405
    %v454 = vpop.f32.mrb[0].mxu0
    %v455 = vadd.f32 %v361, %v454
    %v456 = vpop.f32.mrb[0].mxu0
    %v457 = vpop.f32.mrb[0].mxu0
    %v458 = vadd.f32 %v366, %v457
    %v459 = vpop.f32.mrb[0].mxu0
    %460 = vmatprep.mubr.bf16.mxu0 0
    %461 = vmatmul.mubr.bf16.gmra.mrb[0].mxu0 %v406
    %v462 = vpop.f32.mrb[0].mxu0
    %v463 = vadd.f32 %v371, %v462
    %v464 = vpop.f32.mrb[0].mxu0
    %v465 = vpop.f32.mrb[0].mxu0
    %v466 = vadd.f32 %v376, %v465
    %v467 = vpop.f32.mrb[0].mxu0
    %468 = vmatprep.mubr.bf16.mxu0 0
    %469 = vmatmul.mubr.bf16.gmra.mrb[0].mxu0 %v407
    %v470 = vpop.f32.mrb[0].mxu0
    %v471 = vadd.f32 %v381, %v470
    %v472 = vpop.f32.mrb[0].mxu0
    %v473 = vpop.f32.mrb[0].mxu0
    %v474 = vadd.f32 %v386, %v473
    %v475 = vpop.f32.mrb[0].mxu0
    %476 = vdwg.mxu0
    %v477 = vmax.f32 %v447, 0.0
    %v478 = vmax.f32 %v450, 0.0
    %v479 = vmax.f32 %v455, 0.0
    %v480 = vmax.f32 %v458, 0.0
    %v481 = vmax.f32 %v463, 0.0
    %v482 = vmax.f32 %v466, 0.0
    %v483 = vmax.f32 %v471, 0.0
    %v484 = vmax.f32 %v474, 0.0
    %v485 = vld [vmem:[%s4] sm:$0xf]
    %v486 = vld [vmem:[%s4 + $0x4] sm:$0xf]
    %v487 = vld [vmem:[%s4 + $0x8] sm:$0xf]
    %v488 = vld [vmem:[%s4 + $0xc] sm:$0xf]
    %v489 = vpack.c.bf16 %v478, %v477
    %v490 = vpack.c.bf16 %v480, %v479
    %v491 = vpack.c.bf16 %v482, %v481
    %v492 = vpack.c.bf16 %v484, %v483
    %v493 = vld [vmem:[%s5] sm:$0xff]
    %v494 = vld [vmem:[%s5 + $0x8] sm:$0xff]
    %v495 = vld [vmem:[%s5 + $0x10] sm:$0xff]
    %v496 = vld [vmem:[%s5 + $0x18] sm:$0xff]
    %498 = vset.pattern.permute.xlu0 0
    %499 = vperm.xlu0 %498, %v493
    %v500 = vpop.permute.xlu0 %499
    %503 = vset.pattern.permute.xlu0 0
    %504 = vperm.xlu0 %503, %v494
    %v505 = vpop.permute.xlu0 %504
    %508 = vset.pattern.permute.xlu0 0
    %509 = vperm.xlu0 %508, %v495
    %v510 = vpop.permute.xlu0 %509
    %513 = vset.pattern.permute.xlu0 0
    %514 = vperm.xlu0 %513, %v496
    %v515 = vpop.permute.xlu0 %514
    %v521 = vunpack.c.l.b16 %v485
    %v522 = vunpack.c.l.b16 %v486
    %v523 = vunpack.c.l.b16 %v487
    %v524 = vunpack.c.l.b16 %v488
    %v525 = vpack.c.b16 %v522, %v521
    %v526 = vpack.c.b16 %v524, %v523
    %v528 = vsel %vm170, %v525, 0
    %v531 = vsel %vm170, %v526, 0
    %533 = vmatprep.subr.bf16.mxu0 0
    %534 = vmatpush1.bf16.msra.mxu0 %v489
    %535 = vmatprep.subr.bf16.mxu0 0
    %536 = vmatpush1.bf16.msra.mxu0 %v490
    %537 = vmatprep.subr.bf16.mxu0 0
    %538 = vmatpush1.bf16.msra.mxu0 %v491
    %539 = vmatprep.subr.bf16.mxu0 0
    %540 = vmatpush1.bf16.msra.mxu0 %v492
    %541 = vmatprep.subr.bf16.mxu0 0
    %542 = vmatpush1.bf16.msra.mxu0 0
    %543 = vmatprep.subr.bf16.mxu0 0
    %544 = vmatpush1.bf16.msra.mxu0 0
    %545 = vmatprep.subr.bf16.mxu0 0
    %546 = vmatpush1.bf16.msra.mxu0 0
    %547 = vmatprep.subr.bf16.mxu0 0
    %548 = vmatpush1.bf16.msra.mxu0 0
    %549 = vmatprep.subr.bf16.mxu0 0
    %550 = vmatpush1.bf16.msra.mxu0 0
    %551 = vmatprep.subr.bf16.mxu0 0
    %552 = vmatpush1.bf16.msra.mxu0 0
    %553 = vmatprep.subr.bf16.mxu0 0
    %554 = vmatpush1.bf16.msra.mxu0 0
    %555 = vmatprep.subr.bf16.mxu0 0
    %556 = vmatpush1.bf16.msra.mxu0 0
    %557 = vmatprep.subr.bf16.mxu0 0
    %558 = vmatpush1.bf16.msra.mxu0 0
    %559 = vmatprep.subr.bf16.mxu0 0
    %560 = vmatpush1.bf16.msra.mxu0 0
    %561 = vmatprep.subr.bf16.mxu0 0
    %562 = vmatpush1.bf16.msra.mxu0 0
    %563 = vmatprep.subr.bf16.mxu0 0
    %564 = vmatpush1.bf16.msra.mxu0 0
    %565 = vmatprep.mubr.bf16.mxu0 0
    %566 = vmatmul.mubr.bf16.gmra.mrb[0].mxu0 %v528
    %v567 = vpop.f32.mrb[0].mxu0
    %v568 = vadd.f32 %v500, %v567
    %v569 = vpop.f32.mrb[0].mxu0
    %v570 = vpop.f32.mrb[0].mxu0
    %v571 = vadd.f32 %v505, %v570
    %v572 = vpop.f32.mrb[0].mxu0
    %573 = vmatprep.mubr.bf16.mxu0 0
    %574 = vmatmul.mubr.bf16.gmra.mrb[0].mxu0 %v531
    %v575 = vpop.f32.mrb[0].mxu0
    %v576 = vadd.f32 %v510, %v575
    %v577 = vpop.f32.mrb[0].mxu0
    %v578 = vpop.f32.mrb[0].mxu0
    %v579 = vadd.f32 %v515, %v578
    %v580 = vpop.f32.mrb[0].mxu0
    %581 = vdwg.mxu0
    %v582 = vmax.f32 %v568, 0.0
    %v583 = vmax.f32 %v571, 0.0
    %v584 = vmax.f32 %v576, 0.0
    %v585 = vmax.f32 %v579, 0.0
    %v586 = vld [vmem:[%s6] sm:$0xf]
    %v587 = vld [vmem:[%s6 + $0x4] sm:$0xf]
    %v588 = vpack.c.bf16 %v583, %v582
    %v589 = vpack.c.bf16 %v585, %v584
    %v590 = vld [vmem:[%s7] sm:$0xff]
    %v591 = vld [vmem:[%s7 + $0x8] sm:$0xff]
    %593 = vset.pattern.permute.xlu0 0
    %594 = vperm.xlu0 %593, %v590
    %v595 = vpop.permute.xlu0 %594
    %598 = vset.pattern.permute.xlu0 0
    %599 = vperm.xlu0 %598, %v591
    %v600 = vpop.permute.xlu0 %599
    %v604 = vunpack.c.l.b16 %v586
    %v605 = vunpack.c.l.b16 %v587
    %v606 = vpack.c.b16 %v605, %v604
    %vm607 = vcmask 261120
    %v609 = vsel %vm607, %v606, 0
    %611 = vmatprep.subr.bf16.mxu0 0
    %612 = vmatpush1.bf16.msra.mxu0 %v588
    %613 = vmatprep.subr.bf16.mxu0 0
    %614 = vmatpush1.bf16.msra.mxu0 %v589
    %615 = vmatprep.subr.bf16.mxu0 0
    %616 = vmatpush1.bf16.msra.mxu0 0
    %617 = vmatprep.subr.bf16.mxu0 0
    %618 = vmatpush1.bf16.msra.mxu0 0
    %619 = vmatprep.subr.bf16.mxu0 0
    %620 = vmatpush1.bf16.msra.mxu0 0
    %621 = vmatprep.subr.bf16.mxu0 0
    %622 = vmatpush1.bf16.msra.mxu0 0
    %623 = vmatprep.subr.bf16.mxu0 0
    %624 = vmatpush1.bf16.msra.mxu0 0
    %625 = vmatprep.subr.bf16.mxu0 0
    %626 = vmatpush1.bf16.msra.mxu0 0
    %627 = vmatprep.subr.bf16.mxu0 0
    %628 = vmatpush1.bf16.msra.mxu0 0
    %629 = vmatprep.subr.bf16.mxu0 0
    %630 = vmatpush1.bf16.msra.mxu0 0
    %631 = vmatprep.subr.bf16.mxu0 0
    %632 = vmatpush1.bf16.msra.mxu0 0
    %633 = vmatprep.subr.bf16.mxu0 0
    %634 = vmatpush1.bf16.msra.mxu0 0
    %635 = vmatprep.subr.bf16.mxu0 0
    %636 = vmatpush1.bf16.msra.mxu0 0
    %637 = vmatprep.subr.bf16.mxu0 0
    %638 = vmatpush1.bf16.msra.mxu0 0
    %639 = vmatprep.subr.bf16.mxu0 0
    %640 = vmatpush1.bf16.msra.mxu0 0
    %641 = vmatprep.subr.bf16.mxu0 0
    %642 = vmatpush1.bf16.msra.mxu0 0
    %643 = vmatprep.mubr.bf16.mxu0 0
    %644 = vmatmul.mubr.bf16.gmra.mrb[0].mxu0 %v609
    %v645 = vpop.f32.mrb[0].mxu0
    %v646 = vadd.f32 %v595, %v645
    %v647 = vpop.f32.mrb[0].mxu0
    %v648 = vpop.f32.mrb[0].mxu0
    %v649 = vadd.f32 %v600, %v648
    %v650 = vpop.f32.mrb[0].mxu0
    %651 = vdwg.mxu0
    %v652 = vmax.f32 %v646, 0.0
    %v653 = vmax.f32 %v649, 0.0
    %v654 = vld [vmem:[%s8] sm:$0xff]
    %v655 = vld [vmem:[%s8 + $0x8] sm:$0xff]
    %657 = vset.pattern.permute.xlu0 0
    %658 = vperm.xlu0 %657, %v654
    %v659 = vpop.permute.xlu0 %658
    %662 = vset.pattern.permute.xlu0 0
    %663 = vperm.xlu0 %662, %v655
    %v664 = vpop.permute.xlu0 %663
    %v666 = vmul.f32 %v659, %v652
    %v667 = vmul.f32 %v664, %v653
    %v668 = vadd.f32 %v666, %v667
    %v669 = vrot.slane %v668, 4
    %v670 = vadd.f32 %v668, %v669
    %v671 = vrot.slane %v670, 2
    %v672 = vadd.f32 %v670, %v671
    %v673 = vrot.slane %v672, 1
    %v674 = vadd.f32 %v672, %v673
    %v675 = vld [vmem:[#allocation2] sm:$0x1]
    %677 = vset.pattern.permute.xlu0 0
    %678 = vperm.xlu0 %677, %v675
    %v679 = vpop.permute.xlu0 %678
    %v681 = vlaneseq
    %v682 = vshrl.u32 %v681, 7
    %v683 = vsub.s32 0, %v682
    %v684 = vrot.slane %v679, %v683
    %v685 = vadd.f32 %v674, %v684
    %686 = vst [vmem:[#allocation3] sm:$0x1] %v685
    // Predicated region
    $region42: #{tpu_custom_call.1} parent=1 // pred_check
      _
    $region43: #{tpu_custom_call.1} parent=1 // pred_check_branch
      %688 = sbr.rel (0) target = $region45
    $region44: #{tpu_custom_call.1} parent=1 // pred_region
      %s690 = ssub.s32 16, 16
      %691 = vsyncadd [#allocation4], %s690
      %s693 = sshll.u32 [#allocation3], 4
      %s694 = int_to_ptr.vmem [resolvable:$true] %s693
      %696 = dma.vmem_to_hbm [thread:$0]  %s694, 16, %s10, [#allocation4]
    $region45: #{tpu_custom_call.1} parent=1 // pred_fallthru
      _
    // Predicated region
    $region46: #{tpu_custom_call.1} parent=1 // pred_check
      _
    $region47: #{tpu_custom_call.1} parent=1 // pred_check_branch
      %698 = sbr.rel (0) target = $region49
    $region48: #{tpu_custom_call.1} parent=1 // pred_region
      %699 = dma.done [#allocation4], 16
    $region49: #{tpu_custom_call.1} parent=1 // pred_fallthru
      _
    %700 = vsyncpa [#allocation4], 1

</llo_original>
